<compile_context>
chip_gen: v6e
topology: v6e:2x2x1
jax: 0.10.0
libtpu: 0.0.40
codegen_flags: <defaults>
</compile_context>

<pallas_src>
import functools

import jax
import jax.numpy as jnp
from jax import lax
from jax.experimental import pallas as pl
from jax.experimental.pallas import tpu as pltpu


# ----------------------------- Pallas kernels ------------------------------

def _bn_stats_kernel(x_ref, sum_ref, sq_ref):
    """Per-image, per-channel sum / sum-of-squares.

    x_ref:   (1, C, H*W) block (one whole image, lane-dense).
    sum_ref: (1, C, 1) per-image partial sums.
    sq_ref:  (1, C, 1) per-image partial sums of squares.
    """
    row = x_ref[0]                                           # (C, H*W)
    sum_ref[0] = jnp.sum(row, axis=1, keepdims=True)         # (C, 1)
    sq_ref[0] = jnp.sum(row * row, axis=1, keepdims=True)    # (C, 1)


def _bn_relu_conv_kernel(x_ref, w_ref, s_ref, b_ref, o_ref, a_ref, *,
                         kh, kw, dil, img_w, hw, c):
    """Fused BN(batch stats) + ReLU + dilated valid conv, one whole image per step.

    grid = (N,)
    x_ref: (1, C, H*W)          flattened image (lane-dense)
    w_ref: (Cout, KH*KW*C)      weights, column index = (ky*KW+kx)*C + c   (resident)
    s_ref: (C, 2)               col 0 = mean, col 1 = rstd                 (resident)
    b_ref: (Cout, 1)            bias                                       (resident)
    o_ref: (1, Cout, H*W)       full-width output slab (valid region sliced in wrapper)
    a_ref: (KH*KW*C, H*W)       VMEM scratch: shifted-tap activation slab
    """
    x = x_ref[0]                                   # (C, H*W)
    mean = s_ref[:, 0:1]                           # (C, 1)
    rstd = s_ref[:, 1:2]                           # (C, 1)
    xn = jnp.maximum((x - mean) * rstd, 0.0)       # fused BN + ReLU on the VPU

    # Assemble the im2col-style slab in VMEM: row (t*C + c) holds xn[c] shifted
    # left by off = (ky*dil)*W + kx*dil.  Only output positions that are valid
    # for the "VALID" conv ever read the (zeroed) tail columns' garbage-free
    # region, so the shortened tap slices are exact for every kept output.
    a_ref[...] = jnp.zeros_like(a_ref)
    for ky in range(kh):
        for kx in range(kw):
            off = ky * dil * img_w + kx * dil
            t = ky * kw + kx
            ln = hw - off
            a_ref[t * c:(t + 1) * c, :ln] = xn[:, off:off + ln]

    # Single MXU matmul over the fused (C*KH*KW) contraction dim.
    acc = jnp.dot(w_ref[...], a_ref[...], preferred_element_type=jnp.float32)
    o_ref[0] = (acc + b_ref[...]).astype(o_ref.dtype)        # lane-dense store


# --------------------------------- wrapper ----------------------------------

@functools.partial(jax.jit,
                   static_argnames=("kernel_size", "dilated_rate", "drop_rate", "eps"))
def batch_activ_conv1(x_nchw, weight, bias, *, kernel_size, dilated_rate,
                      drop_rate=0.0, eps=1e-5):
    """Forward pass of `batch_activ_conv1` (NCHW in, NCHW out)."""
    del drop_rate   # TODO(synk): Dropout treated as identity.
    N, C, H, W = x_nchw.shape
    Cout, Cin, KH, KW = weight.shape
    assert Cin == C and KH == kernel_size and KW == kernel_size
    d = int(dilated_rate)
    Ho = H - d * (KH - 1)
    Wo = W - d * (KW - 1)
    HW = H * W

    # Free, contiguous reshape; no transpose of x anywhere.
    x = x_nchw.astype(jnp.float32).reshape(N, C, HW)

    # ---- pass 1: per-image per-channel partial statistics (one DMA per image) ----
    sums, sqs = pl.pallas_call(
        _bn_stats_kernel,
        out_shape=(jax.ShapeDtypeStruct((N, C, 1), jnp.float32),
                   jax.ShapeDtypeStruct((N, C, 1), jnp.float32)),
        grid=(N,),
        in_specs=[pl.BlockSpec((1, C, HW), lambda n: (n, 0, 0))],
        out_specs=(pl.BlockSpec((1, C, 1), lambda n: (n, 0, 0)),
                   pl.BlockSpec((1, C, 1), lambda n: (n, 0, 0))),
        compiler_params=pltpu.CompilerParams(dimension_semantics=("parallel",)),
    )(x)

    cnt = float(N * H * W)
    mean = jnp.sum(sums[:, :, 0], axis=0) / cnt                       # (C,)
    var = jnp.maximum(jnp.sum(sqs[:, :, 0], axis=0) / cnt - mean * mean, 0.0)
    rstd = lax.rsqrt(var + eps)
    stats = jnp.stack([mean, rstd], axis=1)                           # (C, 2)

    # weight (Cout, C, KH, KW) -> (Cout, KH*KW*C), column index = (ky*KW+kx)*C + c
    w2d = jnp.transpose(weight.astype(jnp.float32), (0, 2, 3, 1)).reshape(
        Cout, KH * KW * C)
    b2d = bias.astype(jnp.float32).reshape(Cout, 1)

    # ---- pass 2: fused normalize + ReLU + dilated valid conv + bias ----
    kernel = functools.partial(_bn_relu_conv_kernel, kh=KH, kw=KW, dil=d,
                               img_w=W, hw=HW, c=C)
    out_flat = pl.pallas_call(
        kernel,
        out_shape=jax.ShapeDtypeStruct((N, Cout, HW), jnp.float32),
        grid=(N,),
        in_specs=[
            pl.BlockSpec((1, C, HW), lambda n: (n, 0, 0)),
            pl.BlockSpec((Cout, KH * KW * C), lambda n: (0, 0)),   # VMEM-resident
            pl.BlockSpec((C, 2), lambda n: (0, 0)),                # VMEM-resident
            pl.BlockSpec((Cout, 1), lambda n: (0, 0)),             # VMEM-resident
        ],
        out_specs=pl.BlockSpec((1, Cout, HW), lambda n: (n, 0, 0)),
        scratch_shapes=[pltpu.VMEM((KH * KW * C, HW), jnp.float32)],
        compiler_params=pltpu.CompilerParams(dimension_semantics=("parallel",)),
    )(x, w2d, stats, b2d)

    # Free reshape back to NCHW layout, then crop to the valid conv window.
    out_full = out_flat.reshape(N, Cout, H, W)
    return out_full[:, :, :Ho, :Wo]


# ------------------------------ JAX reference -------------------------------

def _reference(x, weight, bias, kernel_size, dilated_rate, eps=1e-5):
    mean = jnp.mean(x, axis=(0, 2, 3), keepdims=True)
    var = jnp.mean((x - mean) ** 2, axis=(0, 2, 3), keepdims=True)
    xn = jnp.maximum((x - mean) / jnp.sqrt(var + eps), 0.0)
    out = lax.conv_general_dilated(
        xn, weight, window_strides=(1, 1), padding="VALID",
        rhs_dilation=(dilated_rate, dilated_rate),
        dimension_numbers=("NCHW", "OIHW", "NCHW"))
    return out + bias.reshape(1, -1, 1, 1)


# ----------------------------------- main ------------------------------------

if __name__ == "__main__":
    key = jax.random.PRNGKey(0)
    kx, kw, kb = jax.random.split(key, 3)

    N, C, H, W = 2, 4, 16, 16          # small shapes consistent with the module
    Cout, K = 8, 3

    x = jax.random.normal(kx, (N, C, H, W), jnp.float32)
    w = jax.random.normal(kw, (Cout, C, K, K), jnp.float32) * 0.05
    b = jax.random.normal(kb, (Cout,), jnp.float32) * 0.01

    for dil in (1, 2):
        out = batch_activ_conv1(x, w, b, kernel_size=K, dilated_rate=dil,
                                drop_rate=0.0)
        out = jax.block_until_ready(out)
        ref = _reference(x, w, b, K, dil)
        assert out.shape == ref.shape, (out.shape, ref.shape)
        assert bool(jnp.isfinite(out).all())
        err = float(jnp.max(jnp.abs(out - ref)))
        assert err < 1e-3, f"dil={dil} max|err|={err}"

    print("KERNEL_OK")
</pallas_src>

<mosaic_0001>
module attributes {stable_mosaic.version = 11 : i64} {
  func.func @_bn_stats_kernel(%arg0: i32, %arg1: memref<1x4x256xf32, #tpu.memory_space<vmem>>, %arg2: memref<1x4x1xf32, #tpu.memory_space<vmem>>, %arg3: memref<1x4x1xf32, #tpu.memory_space<vmem>>) attributes {dimension_semantics = [#tpu.dimension_semantics<parallel>], iteration_bounds = array<i64: 2>, scalar_prefetch = 0 : i64, scratch_operands = 0 : i64, tpu.core_type = #tpu.core_type<tc>, window_params = [{transform_indices = @transform_0, window_bounds = array<i64: 1, 4, 256>}, {transform_indices = @transform_1, window_bounds = array<i64: 1, 4, 1>}, {transform_indices = @transform_2, window_bounds = array<i64: 1, 4, 1>}]} {
    %c0 = arith.constant 0 : index
    %c0_0 = arith.constant 0 : index
    %c0_1 = arith.constant 0 : index
    %0 = vector.load %arg1[%c0, %c0_0, %c0_1] : memref<1x4x256xf32, #tpu.memory_space<vmem>>, vector<1x4x256xf32>
    %1 = vector.shape_cast %0 : vector<1x4x256xf32> to vector<4x256xf32>
    %cst = arith.constant dense<0.000000e+00> : vector<4xf32>
    %2 = vector.multi_reduction <add>, %1, %cst [1] : vector<4x256xf32> to vector<4xf32>
    %3 = vector.shape_cast %2 : vector<4xf32> to vector<4x1xf32>
    %c0_2 = arith.constant 0 : index
    %c0_3 = arith.constant 0 : index
    %c0_4 = arith.constant 0 : index
    %4 = vector.load %arg2[%c0_2, %c0_3, %c0_4] : memref<1x4x1xf32, #tpu.memory_space<vmem>>, vector<1x4x1xf32>
    %5 = vector.shape_cast %4 : vector<1x4x1xf32> to vector<4x1xf32>
    %6 = vector.shape_cast %3 : vector<4x1xf32> to vector<1x4x1xf32>
    tpu.vector_store %arg2[%c0_2, %c0_3, %c0_4], %6 {strides = array<i32>} : memref<1x4x1xf32, #tpu.memory_space<vmem>>, vector<1x4x1xf32>,
    %7 = arith.mulf %1, %1 : vector<4x256xf32>
    %cst_5 = arith.constant dense<0.000000e+00> : vector<4xf32>
    %8 = vector.multi_reduction <add>, %7, %cst_5 [1] : vector<4x256xf32> to vector<4xf32>
    %9 = vector.shape_cast %8 : vector<4xf32> to vector<4x1xf32>
    %c0_6 = arith.constant 0 : index
    %c0_7 = arith.constant 0 : index
    %c0_8 = arith.constant 0 : index
    %10 = vector.load %arg3[%c0_6, %c0_7, %c0_8] : memref<1x4x1xf32, #tpu.memory_space<vmem>>, vector<1x4x1xf32>
    %11 = vector.shape_cast %10 : vector<1x4x1xf32> to vector<4x1xf32>
    %12 = vector.shape_cast %9 : vector<4x1xf32> to vector<1x4x1xf32>
    tpu.vector_store %arg3[%c0_6, %c0_7, %c0_8], %12 {strides = array<i32>} : memref<1x4x1xf32, #tpu.memory_space<vmem>>, vector<1x4x1xf32>,
    return
  }
  func.func @transform_0(%arg0: i32) -> (i32, i32, i32) {
    %c0_i32 = arith.constant 0 : i32
    %c0_i32_0 = arith.constant 0 : i32
    %c0_i32_1 = arith.constant 0 : i32
    return %arg0, %c0_i32, %c0_i32_0 : i32, i32, i32
  }
  func.func @transform_1(%arg0: i32) -> (i32, i32, i32) {
    %c0_i32 = arith.constant 0 : i32
    %c0_i32_0 = arith.constant 0 : i32
    %c0_i32_1 = arith.constant 0 : i32
    return %arg0, %c0_i32, %c0_i32_0 : i32, i32, i32
  }
  func.func @transform_2(%arg0: i32) -> (i32, i32, i32) {
    %c0_i32 = arith.constant 0 : i32
    %c0_i32_0 = arith.constant 0 : i32
    %c0_i32_1 = arith.constant 0 : i32
    return %arg0, %c0_i32, %c0_i32_0 : i32, i32, i32
  }
}

module attributes {stable_mosaic.version = 11 : i64} {
  func.func @_bn_relu_conv_kernel(%arg0: i32, %arg1: memref<1x4x256xf32, #tpu.memory_space<vmem>>, %arg2: memref<8x36xf32, #tpu.memory_space<vmem>>, %arg3: memref<4x2xf32, #tpu.memory_space<vmem>>, %arg4: memref<8x1xf32, #tpu.memory_space<vmem>>, %arg5: memref<1x8x256xf32, #tpu.memory_space<vmem>>, %arg6: memref<36x256xf32, #tpu.memory_space<vmem>>) attributes {dimension_semantics = [#tpu.dimension_semantics<parallel>], iteration_bounds = array<i64: 2>, scalar_prefetch = 0 : i64, scratch_operands = 1 : i64, tpu.core_type = #tpu.core_type<tc>, window_params = [{transform_indices = @transform_0, window_bounds = array<i64: 1, 4, 256>}, {pipeline_mode = #tpu.pipeline_mode<synchronous>, transform_indices = @transform_1, window_bounds = array<i64: 8, 36>}, {pipeline_mode = #tpu.pipeline_mode<synchronous>, transform_indices = @transform_2, window_bounds = array<i64: 4, 2>}, {pipeline_mode = #tpu.pipeline_mode<synchronous>, transform_indices = @transform_3, window_bounds = array<i64: 8, 1>}, {transform_indices = @transform_4, window_bounds = array<i64: 1, 8, 256>}]} {
    %c0 = arith.constant 0 : index
    %c0_0 = arith.constant 0 : index
    %c0_1 = arith.constant 0 : index
    %0 = vector.load %arg1[%c0, %c0_0, %c0_1] : memref<1x4x256xf32, #tpu.memory_space<vmem>>, vector<1x4x256xf32>
    %1 = vector.shape_cast %0 : vector<1x4x256xf32> to vector<4x256xf32>
    %c0_2 = arith.constant 0 : index
    %c0_3 = arith.constant 0 : index
    %2 = vector.load %arg3[%c0_2, %c0_3] : memref<4x2xf32, #tpu.memory_space<vmem>>, vector<4x1xf32>
    %c0_4 = arith.constant 0 : index
    %c1 = arith.constant 1 : index
    %3 = vector.load %arg3[%c0_4, %c1] : memref<4x2xf32, #tpu.memory_space<vmem>>, vector<4x1xf32>
    %4 = vector.broadcast %2 : vector<4x1xf32> to vector<4x256xf32>
    %5 = arith.subf %1, %4 : vector<4x256xf32>
    %6 = vector.broadcast %3 : vector<4x1xf32> to vector<4x256xf32>
    %7 = arith.mulf %5, %6 : vector<4x256xf32>
    %cst = arith.constant 0.000000e+00 : f32
    %8 = vector.broadcast %cst : f32 to vector<4x256xf32>
    %9 = arith.maximumf %7, %8 : vector<4x256xf32>
    %cst_5 = arith.constant 0.000000e+00 : f32
    %10 = vector.broadcast %cst_5 : f32 to vector<36x256xf32>
    %c0_6 = arith.constant 0 : index
    %c0_7 = arith.constant 0 : index
    %11 = vector.load %arg6[%c0_6, %c0_7] : memref<36x256xf32, #tpu.memory_space<vmem>>, vector<36x256xf32>
    tpu.vector_store %arg6[%c0_6, %c0_7], %10 {strides = array<i32>} : memref<36x256xf32, #tpu.memory_space<vmem>>, vector<36x256xf32>,
    %c0_8 = arith.constant 0 : index
    %c0_9 = arith.constant 0 : index
    %12 = vector.load %arg6[%c0_8, %c0_9] : memref<36x256xf32, #tpu.memory_space<vmem>>, vector<4x256xf32>
    tpu.vector_store %arg6[%c0_8, %c0_9], %9 {strides = array<i32>} : memref<36x256xf32, #tpu.memory_space<vmem>>, vector<4x256xf32>,
    %13 = vector.extract_strided_slice %9 {offsets = [0, 1], sizes = [4, 255], strides = [1, 1]} : vector<4x256xf32> to vector<4x255xf32>
    %c4 = arith.constant 4 : index
    %c0_10 = arith.constant 0 : index
    %14 = vector.load %arg6[%c4, %c0_10] : memref<36x256xf32, #tpu.memory_space<vmem>>, vector<4x255xf32>
    tpu.vector_store %arg6[%c4, %c0_10], %13 {strides = array<i32>} : memref<36x256xf32, #tpu.memory_space<vmem>>, vector<4x255xf32>,
    %15 = vector.extract_strided_slice %9 {offsets = [0, 2], sizes = [4, 254], strides = [1, 1]} : vector<4x256xf32> to vector<4x254xf32>
    %c8 = arith.constant 8 : index
    %c0_11 = arith.constant 0 : index
    %16 = vector.load %arg6[%c8, %c0_11] : memref<36x256xf32, #tpu.memory_space<vmem>>, vector<4x254xf32>
    tpu.vector_store %arg6[%c8, %c0_11], %15 {strides = array<i32>} : memref<36x256xf32, #tpu.memory_space<vmem>>, vector<4x254xf32>,
    %17 = vector.extract_strided_slice %9 {offsets = [0, 16], sizes = [4, 240], strides = [1, 1]} : vector<4x256xf32> to vector<4x240xf32>
    %c12 = arith.constant 12 : index
    %c0_12 = arith.constant 0 : index
    %18 = vector.load %arg6[%c12, %c0_12] : memref<36x256xf32, #tpu.memory_space<vmem>>, vector<4x240xf32>
    tpu.vector_store %arg6[%c12, %c0_12], %17 {strides = array<i32>} : memref<36x256xf32, #tpu.memory_space<vmem>>, vector<4x240xf32>,
    %19 = vector.extract_strided_slice %9 {offsets = [0, 17], sizes = [4, 239], strides = [1, 1]} : vector<4x256xf32> to vector<4x239xf32>
    %c16 = arith.constant 16 : index
    %c0_13 = arith.constant 0 : index
    %20 = vector.load %arg6[%c16, %c0_13] : memref<36x256xf32, #tpu.memory_space<vmem>>, vector<4x239xf32>
    tpu.vector_store %arg6[%c16, %c0_13], %19 {strides = array<i32>} : memref<36x256xf32, #tpu.memory_space<vmem>>, vector<4x239xf32>,
    %21 = vector.extract_strided_slice %9 {offsets = [0, 18], sizes = [4, 238], strides = [1, 1]} : vector<4x256xf32> to vector<4x238xf32>
    %c20 = arith.constant 20 : index
    %c0_14 = arith.constant 0 : index
    %22 = vector.load %arg6[%c20, %c0_14] : memref<36x256xf32, #tpu.memory_space<vmem>>, vector<4x238xf32>
    tpu.vector_store %arg6[%c20, %c0_14], %21 {strides = array<i32>} : memref<36x256xf32, #tpu.memory_space<vmem>>, vector<4x238xf32>,
    %23 = vector.extract_strided_slice %9 {offsets = [0, 32], sizes = [4, 224], strides = [1, 1]} : vector<4x256xf32> to vector<4x224xf32>
    %c24 = arith.constant 24 : index
    %c0_15 = arith.constant 0 : index
    %24 = vector.load %arg6[%c24, %c0_15] : memref<36x256xf32, #tpu.memory_space<vmem>>, vector<4x224xf32>
    tpu.vector_store %arg6[%c24, %c0_15], %23 {strides = array<i32>} : memref<36x256xf32, #tpu.memory_space<vmem>>, vector<4x224xf32>,
    %25 = vector.extract_strided_slice %9 {offsets = [0, 33], sizes = [4, 223], strides = [1, 1]} : vector<4x256xf32> to vector<4x223xf32>
    %c28 = arith.constant 28 : index
    %c0_16 = arith.constant 0 : index
    %26 = vector.load %arg6[%c28, %c0_16] : memref<36x256xf32, #tpu.memory_space<vmem>>, vector<4x223xf32>
    tpu.vector_store %arg6[%c28, %c0_16], %25 {strides = array<i32>} : memref<36x256xf32, #tpu.memory_space<vmem>>, vector<4x223xf32>,
    %27 = vector.extract_strided_slice %9 {offsets = [0, 34], sizes = [4, 222], strides = [1, 1]} : vector<4x256xf32> to vector<4x222xf32>
    %c32 = arith.constant 32 : index
    %c0_17 = arith.constant 0 : index
    %28 = vector.load %arg6[%c32, %c0_17] : memref<36x256xf32, #tpu.memory_space<vmem>>, vector<4x222xf32>
    tpu.vector_store %arg6[%c32, %c0_17], %27 {strides = array<i32>} : memref<36x256xf32, #tpu.memory_space<vmem>>, vector<4x222xf32>,
    %c0_18 = arith.constant 0 : index
    %c0_19 = arith.constant 0 : index
    %29 = vector.load %arg2[%c0_18, %c0_19] : memref<8x36xf32, #tpu.memory_space<vmem>>, vector<8x36xf32>
    %c0_20 = arith.constant 0 : index
    %c0_21 = arith.constant 0 : index
    %30 = vector.load %arg6[%c0_20, %c0_21] : memref<36x256xf32, #tpu.memory_space<vmem>>, vector<36x256xf32>
    %cst_22 = arith.constant dense<0.000000e+00> : vector<8x256xf32>
    %31 = tpu.matmul %29, %30, %cst_22 {dimension_numbers = #tpu.dot_dimension_numbers<[1], [0], [0], [1], [0, 0, 1, 1], [], []>} : vector<8x36xf32>, vector<36x256xf32>, vector<8x256xf32> -> vector<8x256xf32>
    %c0_23 = arith.constant 0 : index
    %c0_24 = arith.constant 0 : index
    %32 = vector.load %arg4[%c0_23, %c0_24] : memref<8x1xf32, #tpu.memory_space<vmem>>, vector<8x1xf32>
    %33 = vector.broadcast %32 : vector<8x1xf32> to vector<8x256xf32>
    %34 = arith.addf %31, %33 : vector<8x256xf32>
    %c0_25 = arith.constant 0 : index
    %c0_26 = arith.constant 0 : index
    %c0_27 = arith.constant 0 : index
    %35 = vector.load %arg5[%c0_25, %c0_26, %c0_27] : memref<1x8x256xf32, #tpu.memory_space<vmem>>, vector<1x8x256xf32>
    %36 = vector.shape_cast %35 : vector<1x8x256xf32> to vector<8x256xf32>
    %37 = vector.shape_cast %34 : vector<8x256xf32> to vector<1x8x256xf32>
    tpu.vector_store %arg5[%c0_25, %c0_26, %c0_27], %37 {strides = array<i32>} : memref<1x8x256xf32, #tpu.memory_space<vmem>>, vector<1x8x256xf32>,
    return
  }
  func.func @transform_0(%arg0: i32) -> (i32, i32, i32) {
    %c0_i32 = arith.constant 0 : i32
    %c0_i32_0 = arith.constant 0 : i32
    %c0_i32_1 = arith.constant 0 : i32
    return %arg0, %c0_i32, %c0_i32_0 : i32, i32, i32
  }
  func.func @transform_1(%arg0: i32) -> (i32, i32) {
    %c0_i32 = arith.constant 0 : i32
    %c0_i32_0 = arith.constant 0 : i32
    %c0_i32_1 = arith.constant 0 : i32
    return %c0_i32, %c0_i32_0 : i32, i32
  }
  func.func @transform_2(%arg0: i32) -> (i32, i32) {
    %c0_i32 = arith.constant 0 : i32
    %c0_i32_0 = arith.constant 0 : i32
    %c0_i32_1 = arith.constant 0 : i32
    return %c0_i32, %c0_i32_0 : i32, i32
  }
  func.func @transform_3(%arg0: i32) -> (i32, i32) {
    %c0_i32 = arith.constant 0 : i32
    %c0_i32_0 = arith.constant 0 : i32
    %c0_i32_1 = arith.constant 0 : i32
    return %c0_i32, %c0_i32_0 : i32, i32
  }
  func.func @transform_4(%arg0: i32) -> (i32, i32, i32) {
    %c0_i32 = arith.constant 0 : i32
    %c0_i32_0 = arith.constant 0 : i32
    %c0_i32_1 = arith.constant 0 : i32
    return %arg0, %c0_i32, %c0_i32_0 : i32, i32, i32
  }
}

</mosaic_0001>

<llo_original>
// kernel: batch_activ_conv1.2
$region0: #{batch_activ_conv1.2}
  #allocation0 [shape = 'u32[]', space=smem, size = 0x4, offset = 0x4, fixed_abs, tag = 'smem constant byte address 0x4 - core index']
  #allocation1 [shape = 'u32[144,128]{1,0:T(1,128)}', space=vmem, size = 0x12000, scoped, tag = 'internal scratch']
  %s0 = inlined_call_operand.vmem [shape: f32[2,4,256], index: 0, kind: input, shape index: {}]
  %s1 = inlined_call_operand.vmem [shape: f32[2,4,1], index: 1, kind: output, shape index: {0}]
  %s2 = inlined_call_operand.vmem [shape: f32[2,4,1], index: 2, kind: output, shape index: {1}]
  %3 = xla_tuple %s1, %s2
  %s4 = sld [smem:[#allocation0]]
  $region45: #{batch_activ_conv1.2} parent=0
    _
  %s6 = ssub.s32 1, %s4
  %s7 = scalar_select 0, %s6, %s4
  loop: start=0, step=1, limit=4
  $region2: #{batch_activ_conv1.2} parent=0 // loop_pre_header
    _
  $region3: #{batch_activ_conv1.2} parent=0 // loop_header
    %s9 = sphi 0, %s13
    %p10 = scmp.ge.s32.totalorder %s9, 4
    %s19 = sphi 0, %s21
    %s22 = sphi 0, %s19
    %s23 = sphi 0, %s22
    %s39 = sphi 0, %s23
    %s45 = sphi 0, %s47
    %s48 = sphi 0, %s45
    %s49 = sphi 0, %s48
    %s65 = sphi 0, %s49
    %s71 = sphi 0, %s73
    %s74 = sphi 0, %s71
    %s75 = sphi 0, %s74
    %s91 = sphi 0, %s75
  $region4: #{batch_activ_conv1.2} parent=0 // loop_header_branch
    %12 = sbr.rel (%p10) target = $region8
  $region5: #{batch_activ_conv1.2} parent=0 // loop_body
    %s14 = ssub.s32 %s9, 1
    %s15 = ssub.s32 %s9, 2
    %s16 = sadd.s32 %s9, 1
    %s17 = ssub.s32 %s9, %s16
    %p18 = scmp.eq.s32.totalorder %s17, 0
    %s20 = sadd.s32 %s19, 1
    %s21 = scalar_select %p18, %s19, %s20
    %p24 = pneg %p18
    %p25 = scmp.eq.s32.totalorder %s9, 1
    %p26 = por %p24, %p25
    %p27 = scmp.ne.s32.totalorder %s19, %s22
    %p28 = scmp.eq.s32.totalorder %s9, 0
    %p29 = por %p27, %p28
    %p30 = scmp.ne.s32.totalorder %s19, %s22
    %p31 = scmp.eq.s32.totalorder %s14, 1
    %p32 = por %p30, %p31
    %p33 = scmp.ne.s32.totalorder %s22, %s23
    %p34 = scmp.eq.s32.totalorder %s14, 0
    %p35 = por %p33, %p34
    %p36 = scmp.ne.s32.totalorder %s22, %s23
    %p37 = scmp.eq.s32.totalorder %s15, 1
    %p38 = por %p36, %p37
    %p40 = scmp.ne.s32.totalorder %s23, %s39
    %p41 = scmp.eq.s32.totalorder %s15, 0
    %p42 = por %p40, %p41
    %s43 = ssub.s32 %s9, %s16
    %p44 = scmp.eq.s32.totalorder %s43, 0
    %s46 = sadd.s32 %s45, 1
    %s47 = scalar_select %p44, %s45, %s46
    %p50 = pneg %p44
    %p51 = scmp.eq.s32.totalorder %s9, 1
    %p52 = por %p50, %p51
    %p53 = scmp.ne.s32.totalorder %s45, %s48
    %p54 = scmp.eq.s32.totalorder %s9, 0
    %p55 = por %p53, %p54
    %p56 = scmp.ne.s32.totalorder %s45, %s48
    %p57 = scmp.eq.s32.totalorder %s14, 1
    %p58 = por %p56, %p57
    %p59 = scmp.ne.s32.totalorder %s48, %s49
    %p60 = scmp.eq.s32.totalorder %s14, 0
    %p61 = por %p59, %p60
    %p62 = scmp.ne.s32.totalorder %s48, %s49
    %p63 = scmp.eq.s32.totalorder %s15, 1
    %p64 = por %p62, %p63
    %p66 = scmp.ne.s32.totalorder %s49, %s65
    %p67 = scmp.eq.s32.totalorder %s15, 0
    %p68 = por %p66, %p67
    %s69 = ssub.s32 %s9, %s16
    %p70 = scmp.eq.s32.totalorder %s69, 0
    %s72 = sadd.s32 %s71, 1
    %s73 = scalar_select %p70, %s71, %s72
    %p76 = pneg %p70
    %p77 = scmp.eq.s32.totalorder %s9, 1
    %p78 = por %p76, %p77
    %p79 = scmp.ne.s32.totalorder %s71, %s74
    %p80 = scmp.eq.s32.totalorder %s9, 0
    %p81 = por %p79, %p80
    %p82 = scmp.ne.s32.totalorder %s71, %s74
    %p83 = scmp.eq.s32.totalorder %s14, 1
    %p84 = por %p82, %p83
    %p85 = scmp.ne.s32.totalorder %s74, %s75
    %p86 = scmp.eq.s32.totalorder %s14, 0
    %p87 = por %p85, %p86
    %p88 = scmp.ne.s32.totalorder %s74, %s75
    %p89 = scmp.eq.s32.totalorder %s15, 1
    %p90 = por %p88, %p89
    %p92 = scmp.ne.s32.totalorder %s75, %s91
    %p93 = scmp.eq.s32.totalorder %s15, 0
    %p94 = por %p92, %p93
    %p95 = scmp.le.s32.totalorder 1, %s9
    %p96 = scmp.lt.s32.totalorder %s9, 3
    %p97 = pnand %p95, %p96
    %p98 = pneg %p97
    // Predicated region
    $region9: #{batch_activ_conv1.2} parent=5 // pred_check
      _
    $region10: #{batch_activ_conv1.2} parent=5 // pred_check_branch
      %100 = sbr.rel (%p97) target = $region12
    $region11: #{batch_activ_conv1.2} parent=5 // pred_region
      %s101 = ssub.s32 %s9, 1
    $region12: #{batch_activ_conv1.2} parent=5 // pred_fallthru
      _
    %p102 = scmp.lt.s32.totalorder %s9, 2
    // Predicated region
    $region13: #{batch_activ_conv1.2} parent=5 // pred_check
      %p103 = pneg %p102
    $region14: #{batch_activ_conv1.2} parent=5 // pred_check_branch
      %105 = sbr.rel (%p103) target = $region16
    $region15: #{batch_activ_conv1.2} parent=5 // pred_region
      // Predicated region
      $region17: #{batch_activ_conv1.2} parent=15 // pred_check
        %p106 = pneg %p29
      $region18: #{batch_activ_conv1.2} parent=15 // pred_check_branch
        %108 = sbr.rel (%p106) target = $region20
      $region19: #{batch_activ_conv1.2} parent=15 // pred_region
        %p109 = scmp.lt.s32.totalorder %s9, 1
        %s110 = scalar_select %p109, %s9, 1
        %s111 = smul.addr %s110, 2
        %s112 = smul.addr %s111, 4
        %s113 = scalar_lea.vmem %s0, %s112
      $region20: #{batch_activ_conv1.2} parent=15 // pred_fallthru
        _
    $region16: #{batch_activ_conv1.2} parent=5 // pred_fallthru
      _
    %p114 = scmp.le.s32.totalorder 1, %s9
    %p115 = scmp.lt.s32.totalorder %s9, 3
    %p116 = pnand %p114, %p115
    %p117 = pneg %p116
    // Predicated region
    $region21: #{batch_activ_conv1.2} parent=5 // pred_check
      _
    $region22: #{batch_activ_conv1.2} parent=5 // pred_check_branch
      %119 = sbr.rel (%p116) target = $region24
    $region23: #{batch_activ_conv1.2} parent=5 // pred_region
      %s120 = ssub.s32 %s9, 1
      %p121 = scmp.lt.s32.totalorder %s14, 1
      %s122 = scalar_select %p121, %s14, 1
      %s123 = smul.addr %s122, 2
      %s124 = smul.addr %s123, 4
      %s125 = scalar_lea.vmem %s0, %s124
      %p126 = pneg %p35
      %p127 = pneg %p32
      %p128 = pneg %p61
      %p129 = pneg %p58
      %p130 = scmp.lt.s32.totalorder %s14, 1
      %s131 = scalar_select %p130, %s14, 1
      %s132 = smul.addr %s131, 4
      %s133 = scalar_lea.vmem %s1, %s132
      %p134 = pneg %p87
      %p135 = pneg %p84
      %p136 = scmp.lt.s32.totalorder %s14, 1
      %s137 = scalar_select %p136, %s14, 1
      %s138 = smul.addr %s137, 4
      %s139 = scalar_lea.vmem %s2, %s138
      %p140 = scmp.lt.s32.totalorder %s14, 1
      %s141 = scalar_select %p140, %s14, 1
      %s142 = smul.addr %s141, 2
      %s143 = smul.addr %s142, 4
      %s144 = scalar_lea.vmem %s0, %s143
      %p145 = scmp.lt.s32.totalorder %s14, 1
      %s146 = scalar_select %p145, %s14, 1
      %s147 = smul.addr %s146, 4
      %s148 = scalar_lea.vmem %s1, %s147
      %p149 = scmp.lt.s32.totalorder %s14, 1
      %s150 = scalar_select %p149, %s14, 1
      %s151 = smul.addr %s150, 4
      %s152 = scalar_lea.vmem %s2, %s151
      %v153 = vld [vmem:[%s144] sm:$0xff]
      %v155 = vcombine.high %v153, %v153
      %vm157 = vcmask 1043456
      %v158 = vsel %vm157, %v153, 0.0
      %v159 = vsel %vm157, %v155, 0.0
      %v160 = vadd.f32 %v158, %v159
      %161 = vadd.xlane.f32.xlu0 %v160
      %v162 = vpop.xlane.xlu0 %161
      %vm163 = vcmask 3072
      %164 = vst.msk [vmem:[%s148] sm:$0xf] %vm163, %v162
      %v165 = vmul.f32 %v153, %v153
      %v167 = vcombine.high %v165, %v165
      %v169 = vsel %vm157, %v165, 0.0
      %v170 = vsel %vm157, %v167, 0.0
      %v171 = vadd.f32 %v169, %v170
      %172 = vadd.xlane.f32.xlu0 %v171
      %v173 = vpop.xlane.xlu0 %172
      %174 = vst.msk [vmem:[%s152] sm:$0xf] %vm163, %v173
      %p175 = scmp.lt.s32.totalorder %s14, 1
      %s176 = scalar_select %p175, %s14, 1
      %s177 = smul.addr %s176, 4
      %s178 = scalar_lea.vmem %s1, %s177
      %p179 = scmp.lt.s32.totalorder %s14, 1
      %s180 = scalar_select %p179, %s14, 1
      %s181 = smul.addr %s180, 4
      %s182 = scalar_lea.vmem %s2, %s181
      // Predicated region
      $region25: #{batch_activ_conv1.2} parent=23 // pred_check
        %p183 = pneg %p58
      $region26: #{batch_activ_conv1.2} parent=23 // pred_check_branch
        %185 = sbr.rel (%p183) target = $region28
      $region27: #{batch_activ_conv1.2} parent=23 // pred_region
        _
      $region28: #{batch_activ_conv1.2} parent=23 // pred_fallthru
        _
      // Predicated region
      $region29: #{batch_activ_conv1.2} parent=23 // pred_check
        %p186 = pneg %p84
      $region30: #{batch_activ_conv1.2} parent=23 // pred_check_branch
        %188 = sbr.rel (%p186) target = $region32
      $region31: #{batch_activ_conv1.2} parent=23 // pred_region
        _
      $region32: #{batch_activ_conv1.2} parent=23 // pred_fallthru
        _
    $region24: #{batch_activ_conv1.2} parent=5 // pred_fallthru
      _
    %p189 = scmp.le.s32.totalorder 2, %s9
    // Predicated region
    $region33: #{batch_activ_conv1.2} parent=5 // pred_check
      %p190 = pneg %p189
    $region34: #{batch_activ_conv1.2} parent=5 // pred_check_branch
      %192 = sbr.rel (%p190) target = $region36
    $region35: #{batch_activ_conv1.2} parent=5 // pred_region
      %s193 = ssub.s32 %s9, 2
      // Predicated region
      $region37: #{batch_activ_conv1.2} parent=35 // pred_check
        %p194 = pneg %p64
      $region38: #{batch_activ_conv1.2} parent=35 // pred_check_branch
        %196 = sbr.rel (%p194) target = $region40
      $region39: #{batch_activ_conv1.2} parent=35 // pred_region
        %p197 = scmp.lt.s32.totalorder %s15, 1
        %s198 = scalar_select %p197, %s15, 1
        %s199 = smul.addr %s198, 4
        %s200 = scalar_lea.vmem %s1, %s199
      $region40: #{batch_activ_conv1.2} parent=35 // pred_fallthru
        _
      // Predicated region
      $region41: #{batch_activ_conv1.2} parent=35 // pred_check
        %p201 = pneg %p90
      $region42: #{batch_activ_conv1.2} parent=35 // pred_check_branch
        %203 = sbr.rel (%p201) target = $region44
      $region43: #{batch_activ_conv1.2} parent=35 // pred_region
        %p204 = scmp.lt.s32.totalorder %s15, 1
        %s205 = scalar_select %p204, %s15, 1
        %s206 = smul.addr %s205, 4
        %s207 = scalar_lea.vmem %s2, %s206
      $region44: #{batch_activ_conv1.2} parent=35 // pred_fallthru
        _
    $region36: #{batch_activ_conv1.2} parent=5 // pred_fallthru
      _
  $region6: #{batch_activ_conv1.2} parent=0 // loop_footer
    %s13 = sadd.s32 1, %s9
  $region7: #{batch_activ_conv1.2} parent=0 // loop_footer_branch
    %8 = sbr.rel target = $region3
  $region8: #{batch_activ_conv1.2} parent=0 // loop_exit
    _

// kernel: batch_activ_conv1.3
$region0: #{batch_activ_conv1.3}
  #allocation0 [shape = 'u32[]', space=smem, size = 0x4, offset = 0x4, fixed_abs, tag = 'smem constant byte address 0x4 - core index']
  #allocation1 [shape = 'u32[144,128]{1,0:T(1,128)}', space=vmem, size = 0x12000, scoped, tag = 'internal scratch']
  #allocation2 [shape = 'f32[36,256]{1,0:T(8,128)}', space=vmem, size = 0xa000, scoped, tag = 'scratch operand']
  %s0 = inlined_call_operand.vmem [shape: f32[2,4,256], index: 0, kind: input, shape index: {}]
  %s1 = inlined_call_operand.vmem [shape: f32[8,36], index: 1, kind: input, shape index: {}]
  %s2 = inlined_call_operand.vmem [shape: f32[4,2], index: 2, kind: input, shape index: {}]
  %s3 = inlined_call_operand.vmem [shape: f32[8,1], index: 3, kind: input, shape index: {}]
  %s4 = inlined_call_operand.vmem [shape: f32[2,8,256], index: 4, kind: output, shape index: {}]
  %s5 = sld [smem:[#allocation0]]
  $region49: #{batch_activ_conv1.3} parent=0
    _
  %s7 = ssub.s32 1, %s5
  %s8 = scalar_select 0, %s7, %s5
  loop: start=0, step=1, limit=4
  $region2: #{batch_activ_conv1.3} parent=0 // loop_pre_header
    _
  $region3: #{batch_activ_conv1.3} parent=0 // loop_header
    %s10 = sphi 0, %s14
    %p11 = scmp.ge.s32.totalorder %s10, 4
    %s20 = sphi 0, %s22
    %s23 = sphi 0, %s20
    %s24 = sphi 0, %s23
    %s40 = sphi 0, %s24
    %s44 = sphi 0, %s44
    %s46 = sphi 0, %s44
    %s47 = sphi 0, %s46
    %s61 = sphi 0, %s47
    %s65 = sphi 0, %s65
    %s67 = sphi 0, %s65
    %s68 = sphi 0, %s67
    %s82 = sphi 0, %s68
    %s86 = sphi 0, %s86
    %s88 = sphi 0, %s86
    %s89 = sphi 0, %s88
    %s103 = sphi 0, %s89
    %s109 = sphi 0, %s111
    %s112 = sphi 0, %s109
    %s113 = sphi 0, %s112
    %s129 = sphi 0, %s113
  $region4: #{batch_activ_conv1.3} parent=0 // loop_header_branch
    %13 = sbr.rel (%p11) target = $region8
  $region5: #{batch_activ_conv1.3} parent=0 // loop_body
    %s15 = ssub.s32 %s10, 1
    %s16 = ssub.s32 %s10, 2
    %s17 = sadd.s32 %s10, 1
    %s18 = ssub.s32 %s10, %s17
    %p19 = scmp.eq.s32.totalorder %s18, 0
    %s21 = sadd.s32 %s20, 1
    %s22 = scalar_select %p19, %s20, %s21
    %p25 = pneg %p19
    %p26 = scmp.eq.s32.totalorder %s10, 1
    %p27 = por %p25, %p26
    %p28 = scmp.ne.s32.totalorder %s20, %s23
    %p29 = scmp.eq.s32.totalorder %s10, 0
    %p30 = por %p28, %p29
    %p31 = scmp.ne.s32.totalorder %s20, %s23
    %p32 = scmp.eq.s32.totalorder %s15, 1
    %p33 = por %p31, %p32
    %p34 = scmp.ne.s32.totalorder %s23, %s24
    %p35 = scmp.eq.s32.totalorder %s15, 0
    %p36 = por %p34, %p35
    %p37 = scmp.ne.s32.totalorder %s23, %s24
    %p38 = scmp.eq.s32.totalorder %s16, 1
    %p39 = por %p37, %p38
    %p41 = scmp.ne.s32.totalorder %s24, %s40
    %p42 = scmp.eq.s32.totalorder %s16, 0
    %p43 = por %p41, %p42
    %s45 = sadd.s32 %s44, 1
    %p48 = scmp.eq.s32.totalorder %s10, 1
    %p49 = scmp.ne.s32.totalorder %s44, %s46
    %p50 = scmp.eq.s32.totalorder %s10, 0
    %p51 = por %p49, %p50
    %p52 = scmp.ne.s32.totalorder %s44, %s46
    %p53 = scmp.eq.s32.totalorder %s15, 1
    %p54 = por %p52, %p53
    %p55 = scmp.ne.s32.totalorder %s46, %s47
    %p56 = scmp.eq.s32.totalorder %s15, 0
    %p57 = por %p55, %p56
    %p58 = scmp.ne.s32.totalorder %s46, %s47
    %p59 = scmp.eq.s32.totalorder %s16, 1
    %p60 = por %p58, %p59
    %p62 = scmp.ne.s32.totalorder %s47, %s61
    %p63 = scmp.eq.s32.totalorder %s16, 0
    %p64 = por %p62, %p63
    %s66 = sadd.s32 %s65, 1
    %p69 = scmp.eq.s32.totalorder %s10, 1
    %p70 = scmp.ne.s32.totalorder %s65, %s67
    %p71 = scmp.eq.s32.totalorder %s10, 0
    %p72 = por %p70, %p71
    %p73 = scmp.ne.s32.totalorder %s65, %s67
    %p74 = scmp.eq.s32.totalorder %s15, 1
    %p75 = por %p73, %p74
    %p76 = scmp.ne.s32.totalorder %s67, %s68
    %p77 = scmp.eq.s32.totalorder %s15, 0
    %p78 = por %p76, %p77
    %p79 = scmp.ne.s32.totalorder %s67, %s68
    %p80 = scmp.eq.s32.totalorder %s16, 1
    %p81 = por %p79, %p80
    %p83 = scmp.ne.s32.totalorder %s68, %s82
    %p84 = scmp.eq.s32.totalorder %s16, 0
    %p85 = por %p83, %p84
    %s87 = sadd.s32 %s86, 1
    %p90 = scmp.eq.s32.totalorder %s10, 1
    %p91 = scmp.ne.s32.totalorder %s86, %s88
    %p92 = scmp.eq.s32.totalorder %s10, 0
    %p93 = por %p91, %p92
    %p94 = scmp.ne.s32.totalorder %s86, %s88
    %p95 = scmp.eq.s32.totalorder %s15, 1
    %p96 = por %p94, %p95
    %p97 = scmp.ne.s32.totalorder %s88, %s89
    %p98 = scmp.eq.s32.totalorder %s15, 0
    %p99 = por %p97, %p98
    %p100 = scmp.ne.s32.totalorder %s88, %s89
    %p101 = scmp.eq.s32.totalorder %s16, 1
    %p102 = por %p100, %p101
    %p104 = scmp.ne.s32.totalorder %s89, %s103
    %p105 = scmp.eq.s32.totalorder %s16, 0
    %p106 = por %p104, %p105
    %s107 = ssub.s32 %s10, %s17
    %p108 = scmp.eq.s32.totalorder %s107, 0
    %s110 = sadd.s32 %s109, 1
    %s111 = scalar_select %p108, %s109, %s110
    %p114 = pneg %p108
    %p115 = scmp.eq.s32.totalorder %s10, 1
    %p116 = por %p114, %p115
    %p117 = scmp.ne.s32.totalorder %s109, %s112
    %p118 = scmp.eq.s32.totalorder %s10, 0
    %p119 = por %p117, %p118
    %p120 = scmp.ne.s32.totalorder %s109, %s112
    %p121 = scmp.eq.s32.totalorder %s15, 1
    %p122 = por %p120, %p121
    %p123 = scmp.ne.s32.totalorder %s112, %s113
    %p124 = scmp.eq.s32.totalorder %s15, 0
    %p125 = por %p123, %p124
    %p126 = scmp.ne.s32.totalorder %s112, %s113
    %p127 = scmp.eq.s32.totalorder %s16, 1
    %p128 = por %p126, %p127
    %p130 = scmp.ne.s32.totalorder %s113, %s129
    %p131 = scmp.eq.s32.totalorder %s16, 0
    %p132 = por %p130, %p131
    %p133 = scmp.le.s32.totalorder 1, %s10
    %p134 = scmp.lt.s32.totalorder %s10, 3
    %p135 = pnand %p133, %p134
    %p136 = pneg %p135
    // Predicated region
    $region9: #{batch_activ_conv1.3} parent=5 // pred_check
      _
    $region10: #{batch_activ_conv1.3} parent=5 // pred_check_branch
      %138 = sbr.rel (%p135) target = $region12
    $region11: #{batch_activ_conv1.3} parent=5 // pred_region
      %s139 = ssub.s32 %s10, 1
      // Predicated region
      $region13: #{batch_activ_conv1.3} parent=11 // pred_check
        %p140 = pneg %p57
      $region14: #{batch_activ_conv1.3} parent=11 // pred_check_branch
        %142 = sbr.rel (%p140) target = $region16
      $region15: #{batch_activ_conv1.3} parent=11 // pred_region
        _
      $region16: #{batch_activ_conv1.3} parent=11 // pred_fallthru
        _
      // Predicated region
      $region17: #{batch_activ_conv1.3} parent=11 // pred_check
        %p143 = pneg %p78
      $region18: #{batch_activ_conv1.3} parent=11 // pred_check_branch
        %145 = sbr.rel (%p143) target = $region20
      $region19: #{batch_activ_conv1.3} parent=11 // pred_region
        _
      $region20: #{batch_activ_conv1.3} parent=11 // pred_fallthru
        _
      // Predicated region
      $region21: #{batch_activ_conv1.3} parent=11 // pred_check
        %p146 = pneg %p99
      $region22: #{batch_activ_conv1.3} parent=11 // pred_check_branch
        %148 = sbr.rel (%p146) target = $region24
      $region23: #{batch_activ_conv1.3} parent=11 // pred_region
        _
      $region24: #{batch_activ_conv1.3} parent=11 // pred_fallthru
        _
    $region12: #{batch_activ_conv1.3} parent=5 // pred_fallthru
      _
    %p149 = scmp.lt.s32.totalorder %s10, 2
    // Predicated region
    $region25: #{batch_activ_conv1.3} parent=5 // pred_check
      %p150 = pneg %p149
    $region26: #{batch_activ_conv1.3} parent=5 // pred_check_branch
      %152 = sbr.rel (%p150) target = $region28
    $region27: #{batch_activ_conv1.3} parent=5 // pred_region
      // Predicated region
      $region29: #{batch_activ_conv1.3} parent=27 // pred_check
        %p153 = pneg %p30
      $region30: #{batch_activ_conv1.3} parent=27 // pred_check_branch
        %155 = sbr.rel (%p153) target = $region32
      $region31: #{batch_activ_conv1.3} parent=27 // pred_region
        %p156 = scmp.lt.s32.totalorder %s10, 1
        %s157 = scalar_select %p156, %s10, 1
        %s158 = smul.addr %s157, 2
        %s159 = smul.addr %s158, 4
        %s160 = scalar_lea.vmem %s0, %s159
      $region32: #{batch_activ_conv1.3} parent=27 // pred_fallthru
        _
    $region28: #{batch_activ_conv1.3} parent=5 // pred_fallthru
      _
    %p161 = scmp.le.s32.totalorder 1, %s10
    %p162 = scmp.lt.s32.totalorder %s10, 3
    %p163 = pnand %p161, %p162
    %p164 = pneg %p163
    // Predicated region
    $region33: #{batch_activ_conv1.3} parent=5 // pred_check
      _
    $region34: #{batch_activ_conv1.3} parent=5 // pred_check_branch
      %166 = sbr.rel (%p163) target = $region36
    $region35: #{batch_activ_conv1.3} parent=5 // pred_region
      %s167 = ssub.s32 %s10, 1
      %p168 = scmp.lt.s32.totalorder %s15, 1
      %s169 = scalar_select %p168, %s15, 1
      %s170 = smul.addr %s169, 2
      %s171 = smul.addr %s170, 4
      %s172 = scalar_lea.vmem %s0, %s171
      %p173 = pneg %p36
      %p174 = pneg %p33
      %p175 = pneg %p57
      %p176 = pneg %p54
      %p177 = pneg %p78
      %p178 = pneg %p75
      %p179 = pneg %p99
      %p180 = pneg %p96
      %p181 = pneg %p125
      %p182 = pneg %p122
      %p183 = scmp.lt.s32.totalorder %s15, 1
      %s184 = scalar_select %p183, %s15, 1
      %s185 = smul.addr %s184, 2
      %s186 = smul.addr %s185, 8
      %s187 = scalar_lea.vmem %s4, %s186
      %p188 = scmp.lt.s32.totalorder %s15, 1
      %s189 = scalar_select %p188, %s15, 1
      %s190 = smul.addr %s189, 2
      %s191 = smul.addr %s190, 4
      %s192 = scalar_lea.vmem %s0, %s191
      %p193 = scmp.lt.s32.totalorder %s15, 1
      %s194 = scalar_select %p193, %s15, 1
      %s195 = smul.addr %s194, 2
      %s196 = smul.addr %s195, 8
      %s197 = scalar_lea.vmem %s4, %s196
      %v198 = vld [vmem:[%s192] sm:$0xff]
      %v199 = vld [vmem:[%s2] sm:$0xf]
      %201 = vset.pattern.permute.xlu0 0
      %202 = vperm.xlu0 %201, %v199
      %v203 = vpop.permute.xlu0 %202
      %v205 = vunpack.c.l.s4 839922192
      %v206 = vunpack.c.0.s8 %v205
      %v207 = vlaneseq
      %v208 = vshrl.u32 %v207, 7
      %v209 = vsub.s32 %v206, %v208
      %v210 = vrot.slane %v203, %v209
      %v212 = vsub.f32 %v198, %v210
      %213 = vset.pattern.permute.xlu0 1
      %214 = vperm.xlu0 %213, %v199
      %v215 = vpop.permute.xlu0 %214
      %v217 = vunpack.c.l.s4 839922192
      %v218 = vunpack.c.0.s8 %v217
      %v219 = vlaneseq
      %v220 = vshrl.u32 %v219, 7
      %v221 = vsub.s32 %v218, %v220
      %v222 = vrot.slane %v215, %v221
      %v224 = vmul.f32 %v212, %v222
      %v225 = vmax.f32 %v224, 0.0
      %226 = vst [vmem:[#allocation2] sm:$0xff] 0.0
      %227 = vst [vmem:[#allocation2 + $0x8] sm:$0xff] 0.0
      %228 = vst [vmem:[#allocation2 + $0x10] sm:$0xff] 0.0
      %229 = vst [vmem:[#allocation2 + $0x18] sm:$0xff] 0.0
      %230 = vst [vmem:[#allocation2 + $0x20] sm:$0xff] 0.0
      %231 = vst [vmem:[#allocation2 + $0x28] sm:$0xff] 0.0
      %232 = vst [vmem:[#allocation2 + $0x30] sm:$0xff] 0.0
      %233 = vst [vmem:[#allocation2 + $0x38] sm:$0xff] 0.0
      %234 = vst [vmem:[#allocation2 + $0x40] sm:$0xf] 0.0
      %235 = vst [vmem:[#allocation2 + $0x48] sm:$0xf] 0.0
      %v237 = vcombine.high %v225, %v225
      %239 = vst [vmem:[#allocation2] sm:$0xf] %v225
      %240 = vst [vmem:[#allocation2 + $0x8] sm:$0xf] %v237
      %v241 = vcombine.low %v225, %v225
      %242 = vrot.lane.b32.xlu0 %v241, 127
      %v243 = vpop.permute.xlu0 %242
      %244 = vrot.lane.b32.xlu0 %v225, 127
      %v245 = vpop.permute.xlu0 %244
      %vm246 = vcmask 1039360
      %v247 = vsel %vm246, %v243, %v245
      %250 = vst [vmem:[#allocation2] sm:$0xf0] %v247
      %vm251 = vcmask 1039364
      %252 = vst.msk [vmem:[#allocation2 + $0x8] sm:$0xf0] %vm251, %v245
      %253 = vrot.lane.b32.xlu0 %v225, 126
      %v254 = vpop.permute.xlu0 %253
      %255 = vrot.lane.b32.xlu0 %v237, 126
      %v256 = vpop.permute.xlu0 %255
      %vm257 = vcmask 1031168
      %v258 = vsel %vm257, %v254, %v256
      %261 = vst [vmem:[#allocation2 + $0x10] sm:$0xf] %v258
      %vm262 = vcmask 1027072
      %263 = vst.msk [vmem:[#allocation2 + $0x18] sm:$0xf] %vm262, %v256
      %264 = vrot.lane.b32.xlu0 %v241, 112
      %v265 = vpop.permute.xlu0 %264
      %266 = vrot.lane.b32.xlu0 %v225, 112
      %v267 = vpop.permute.xlu0 %266
      %vm268 = vcmask 916480
      %v269 = vsel %vm268, %v265, %v267
      %272 = vst [vmem:[#allocation2 + $0x10] sm:$0xf0] %v269
      %vm273 = vcmask 916484
      %274 = vst.msk [vmem:[#allocation2 + $0x18] sm:$0xf0] %vm273, %v267
      %275 = vrot.lane.b32.xlu0 %v225, 111
      %v276 = vpop.permute.xlu0 %275
      %277 = vrot.lane.b32.xlu0 %v237, 111
      %v278 = vpop.permute.xlu0 %277
      %vm279 = vcmask 908288
      %v280 = vsel %vm279, %v276, %v278
      %283 = vst [vmem:[#allocation2 + $0x20] sm:$0xf] %v280
      %vm284 = vcmask 904192
      %285 = vst.msk [vmem:[#allocation2 + $0x28] sm:$0xf] %vm284, %v278
      %286 = vrot.lane.b32.xlu0 %v241, 110
      %v287 = vpop.permute.xlu0 %286
      %288 = vrot.lane.b32.xlu0 %v225, 110
      %v289 = vpop.permute.xlu0 %288
      %vm290 = vcmask 900096
      %v291 = vsel %vm290, %v287, %v289
      %294 = vst [vmem:[#allocation2 + $0x20] sm:$0xf0] %v291
      %vm295 = vcmask 900100
      %296 = vst.msk [vmem:[#allocation2 + $0x28] sm:$0xf0] %vm295, %v289
      %297 = vrot.lane.b32.xlu0 %v225, 96
      %v298 = vpop.permute.xlu0 %297
      %299 = vrot.lane.b32.xlu0 %v237, 96
      %v300 = vpop.permute.xlu0 %299
      %vm301 = vcmask 785408
      %v302 = vsel %vm301, %v298, %v300
      %305 = vst [vmem:[#allocation2 + $0x30] sm:$0xf] %v302
      %vm306 = vcmask 781312
      %307 = vst.msk [vmem:[#allocation2 + $0x38] sm:$0xf] %vm306, %v300
      %308 = vrot.lane.b32.xlu0 %v241, 95
      %v309 = vpop.permute.xlu0 %308
      %310 = vrot.lane.b32.xlu0 %v225, 95
      %v311 = vpop.permute.xlu0 %310
      %vm312 = vcmask 777216
      %v313 = vsel %vm312, %v309, %v311
      %316 = vst [vmem:[#allocation2 + $0x30] sm:$0xf0] %v313
      %vm317 = vcmask 777220
      %318 = vst.msk [vmem:[#allocation2 + $0x38] sm:$0xf0] %vm317, %v311
      %319 = vrot.lane.b32.xlu0 %v225, 94
      %v320 = vpop.permute.xlu0 %319
      %321 = vrot.lane.b32.xlu0 %v237, 94
      %v322 = vpop.permute.xlu0 %321
      %vm323 = vcmask 769024
      %v324 = vsel %vm323, %v320, %v322
      %327 = vst [vmem:[#allocation2 + $0x40] sm:$0xf] %v324
      %vm328 = vcmask 764928
      %329 = vst.msk [vmem:[#allocation2 + $0x48] sm:$0xf] %vm328, %v322
      %v330 = vld [vmem:[%s1] sm:$0xff]
      %v331 = vld [vmem:[#allocation2] sm:$0xff]
      %v332 = vld [vmem:[#allocation2 + $0x8] sm:$0xff]
      %v333 = vld [vmem:[#allocation2 + $0x10] sm:$0xff]
      %v334 = vld [vmem:[#allocation2 + $0x18] sm:$0xff]
      %v335 = vld [vmem:[#allocation2 + $0x20] sm:$0xff]
      %v336 = vld [vmem:[#allocation2 + $0x28] sm:$0xff]
      %v337 = vld [vmem:[#allocation2 + $0x30] sm:$0xff]
      %v338 = vld [vmem:[#allocation2 + $0x38] sm:$0xff]
      %v339 = vld [vmem:[#allocation2 + $0x40] sm:$0xf]
      %v340 = vld [vmem:[#allocation2 + $0x48] sm:$0xf]
      %v341 = vld [vmem:[%s3] sm:$0xff]
      %343 = vset.pattern.permute.xlu0 0
      %344 = vperm.xlu0 %343, %v341
      %v345 = vpop.permute.xlu0 %344
      %vm347 = vcmask 293888
      %v349 = vsel %vm347, %v330, 0
      %vm351 = vcmask 1043456
      %v353 = vsel %vm351, %v339, 0
      %v356 = vsel %vm351, %v340, 0
      %358 = vmatprep.subr.mxu0 0.0
      %359 = vmatpush1.msra.mxu0 0.0
      %360 = vmatprep.subr.mxu0 0.0
      %361 = vmatpush1.msra.mxu0 0.0
      %362 = vmatprep.subr.mxu0 0.0
      %363 = vmatpush1.msra.mxu0 0.0
      %364 = vmatprep.subr.mxu0 0.0
      %365 = vmatpush1.msra.mxu0 0.0
      %366 = vmatprep.subr.mxu0 0.0
      %367 = vmatpush1.msra.mxu0 0.0
      %368 = vmatprep.subr.mxu0 0.0
      %369 = vmatpush1.msra.mxu0 0.0
      %370 = vmatprep.subr.mxu0 0.0
      %371 = vmatpush1.msra.mxu0 0.0
      %372 = vmatprep.subr.mxu0 0.0
      %373 = vmatpush1.msra.mxu0 0.0
      %374 = vmatprep.subr.mxu0 0.0
      %375 = vmatpush1.msra.mxu0 0.0
      %376 = vmatprep.subr.mxu0 0.0
      %377 = vmatpush1.msra.mxu0 0.0
      %378 = vmatprep.subr.mxu0 0.0
      %379 = vmatpush1.msra.mxu0 0.0
      %380 = vmatprep.subr.mxu0 %v356
      %381 = vmatpush1.msra.mxu0 %v353
      %382 = vmatprep.subr.mxu0 %v338
      %383 = vmatpush1.msra.mxu0 %v337
      %384 = vmatprep.subr.mxu0 %v336
      %385 = vmatpush1.msra.mxu0 %v335
      %386 = vmatprep.subr.mxu0 %v334
      %387 = vmatpush1.msra.mxu0 %v333
      %388 = vmatprep.subr.mxu0 %v332
      %389 = vmatpush1.msra.mxu0 %v331
      %390 = vmatprep.subr.mxu0 0.0
      %391 = vmatpush2.msra.mxu0 0.0
      %392 = vmatprep.subr.mxu0 0.0
      %393 = vmatpush2.msra.mxu0 0.0
      %394 = vmatprep.subr.mxu0 0.0
      %395 = vmatpush2.msra.mxu0 0.0
      %396 = vmatprep.subr.mxu0 0.0
      %397 = vmatpush2.msra.mxu0 0.0
      %398 = vmatprep.subr.mxu0 0.0
      %399 = vmatpush2.msra.mxu0 0.0
      %400 = vmatprep.subr.mxu0 0.0
      %401 = vmatpush2.msra.mxu0 0.0
      %402 = vmatprep.subr.mxu0 0.0
      %403 = vmatpush2.msra.mxu0 0.0
      %404 = vmatprep.subr.mxu0 0.0
      %405 = vmatpush2.msra.mxu0 0.0
      %406 = vmatprep.subr.mxu0 0.0
      %407 = vmatpush2.msra.mxu0 0.0
      %408 = vmatprep.subr.mxu0 0.0
      %409 = vmatpush2.msra.mxu0 0.0
      %410 = vmatprep.subr.mxu0 0.0
      %411 = vmatpush2.msra.mxu0 0.0
      %412 = vmatprep.subr.mxu0 0.0
      %413 = vmatpush2.msra.mxu0 0.0
      %414 = vmatprep.subr.mxu0 0.0
      %415 = vmatpush2.msra.mxu0 0.0
      %416 = vmatprep.subr.mxu0 0.0
      %417 = vmatpush2.msra.mxu0 0.0
      %418 = vmatprep.subr.mxu0 0.0
      %419 = vmatpush2.msra.mxu0 0.0
      %420 = vmatprep.subr.mxu0 0.0
      %421 = vmatpush2.msra.mxu0 0.0
      %422 = vmatprep.mubr.f32.mxu0 0.0
      %423 = vmatmul.mubr.f32.gmra.mxu0 %v349
      %v424 = vpop.f32.mrf.mxu0
      %v425 = vadd.f32 %v345, %v424
      %v426 = vpop.f32.mrf.mxu0
      %v427 = vadd.f32 %v345, %v426
      %428 = vdwg.mxu0
      %429 = vst [vmem:[%s197] sm:$0xff] %v425
      %430 = vst [vmem:[%s197 + $0x8] sm:$0xff] %v427
      %p431 = scmp.lt.s32.totalorder %s15, 1
      %s432 = scalar_select %p431, %s15, 1
      %s433 = smul.addr %s432, 2
      %s434 = smul.addr %s433, 8
      %s435 = scalar_lea.vmem %s4, %s434
      // Predicated region
      $region37: #{batch_activ_conv1.3} parent=35 // pred_check
        %p436 = pneg %p122
      $region38: #{batch_activ_conv1.3} parent=35 // pred_check_branch
        %438 = sbr.rel (%p436) target = $region40
      $region39: #{batch_activ_conv1.3} parent=35 // pred_region
        _
      $region40: #{batch_activ_conv1.3} parent=35 // pred_fallthru
        _
    $region36: #{batch_activ_conv1.3} parent=5 // pred_fallthru
      _
    %p439 = scmp.le.s32.totalorder 2, %s10
    // Predicated region
    $region41: #{batch_activ_conv1.3} parent=5 // pred_check
      %p440 = pneg %p439
    $region42: #{batch_activ_conv1.3} parent=5 // pred_check_branch
      %442 = sbr.rel (%p440) target = $region44
    $region43: #{batch_activ_conv1.3} parent=5 // pred_region
      %s443 = ssub.s32 %s10, 2
      // Predicated region
      $region45: #{batch_activ_conv1.3} parent=43 // pred_check
        %p444 = pneg %p128
      $region46: #{batch_activ_conv1.3} parent=43 // pred_check_branch
        %446 = sbr.rel (%p444) target = $region48
      $region47: #{batch_activ_conv1.3} parent=43 // pred_region
        %p447 = scmp.lt.s32.totalorder %s16, 1
        %s448 = scalar_select %p447, %s16, 1
        %s449 = smul.addr %s448, 2
        %s450 = smul.addr %s449, 8
        %s451 = scalar_lea.vmem %s4, %s450
      $region48: #{batch_activ_conv1.3} parent=43 // pred_fallthru
        _
    $region44: #{batch_activ_conv1.3} parent=5 // pred_fallthru
      _
  $region6: #{batch_activ_conv1.3} parent=0 // loop_footer
    %s14 = sadd.s32 1, %s10
  $region7: #{batch_activ_conv1.3} parent=0 // loop_footer_branch
    %9 = sbr.rel target = $region3
  $region8: #{batch_activ_conv1.3} parent=0 // loop_exit
    _

</llo_original>
